<compile_context>
chip_gen: v7x
topology: tpu7x:2x2x1
jax: 0.10.0
libtpu: 0.0.40
codegen_flags: <defaults>
</compile_context>

<pallas_src>
import functools

import jax
import jax.numpy as jnp
from jax.experimental import pallas as pl
from jax.experimental.pallas import tpu as pltpu


def _round_up(a, b):
    return (a + b - 1) // b * b


def _physical_vmem_bytes():
    """Per-TensorCore physical VMEM, conservatively estimated."""
    try:
        info = pltpu.get_tpu_info()
        cap = getattr(info, "vmem_capacity_bytes", None)
        if cap:
            return int(cap)
    except Exception:
        pass
    try:
        kind = jax.devices()[0].device_kind.lower()
    except Exception:
        kind = ""
    if "v7" in kind or "7x" in kind:
        return 64 << 20
    if "v5" in kind or "v6" in kind:
        return 128 << 20
    return 64 << 20  # unknown generation: be conservative


def _pick_block_tokens(n, target):
    """Pick a sublane-aligned token-block size.

    Prefers the largest multiple of 8 <= target that divides n exactly, so no
    output padding (and no post-kernel slice copy) is needed; falls back to a
    padded layout if n is not 8-aligned or only tiny divisors exist.
    """
    t_target = max(8, min(_round_up(target, 8), _round_up(n, 8)))
    if n % 8 == 0:
        first = min(t_target, n)
        for cand in range(first, 0, -8):
            if n % cand == 0:
                if cand >= 64 or cand == first:
                    return cand
                break
    return t_target


def _token_embed_kernel(ids_ref, table_ref, out_ref, *, block_tokens, l2norm_embed):
    """One grid step gathers a (block_tokens, dim) slab of embedding rows.

    ids_ref:   SMEM scalar-prefetch ref with all (padded, clamped) ids, int32[n_pad]
    table_ref: full (num_tokens, dim) embedding table, resident in VMEM
    out_ref:   (block_tokens, dim) output block
    """
    base = pl.program_id(0) * block_tokens

    # Static loop over groups of 8 tokens: trip count is a compile-time
    # constant, so all loads/stores/address math is visible to the scheduler.
    for g in range(block_tokens // 8):
        t0 = g * 8
        # 8 single-row dynamic slices of the VMEM-resident table, packed into
        # one full (8, dim) tile (vreg-level packing work, not vst-slot work).
        rows = [table_ref[pl.ds(ids_ref[base + t0 + u], 1), :] for u in range(8)]
        tile = jnp.concatenate(rows, axis=0)

        if l2norm_embed:
            # F.normalize(t, p=2, dim=-1) == t * rsqrt(max(sum(t^2), eps^2)),
            # eps=1e-12, fused at tile granularity so the block is not
            # re-read/re-written in a second pass.
            tile32 = tile.astype(jnp.float32)
            ssq = jnp.sum(tile32 * tile32, axis=-1, keepdims=True)
            inv = jax.lax.rsqrt(jnp.maximum(ssq, 1e-24))          # EUP rsqrt
            tile = (tile32 * inv).astype(out_ref.dtype)

        # One unmasked, sublane-aligned store per 8 tokens.
        out_ref[pl.ds(t0, 8), :] = tile


def token_embedding(x, emb_table, *, l2norm_embed=False, block_tokens=512):
    """x: int [B, S] token ids; emb_table: [num_tokens, dim] -> [B, S, dim]."""
    B, S = x.shape
    num_tokens, dim = emb_table.shape
    itemsize = jnp.dtype(emb_table.dtype).itemsize

    n = B * S
    t_blk = _pick_block_tokens(n, block_tokens)
    n_pad = _round_up(n, t_blk)
    num_blocks = n_pad // t_blk

    # Flat ids, clamped so an out-of-range id can never index outside the
    # VMEM-resident table (defined behaviour instead of an OOB read; note
    # nn.Embedding would raise for such ids).
    ids = jnp.clip(x.reshape(-1).astype(jnp.int32), 0, num_tokens - 1)
    if n_pad != n:
        ids = jnp.pad(ids, (0, n_pad - n))
    # TODO(synk): for very long sequences (B*S in the 100Ks) deliver ids per
    # grid step via an SMEM-blocked input instead of one scalar-prefetch array
    # (1-D SMEM arrays pad to next_pow2(4*N) bytes).

    # Generation-aware VMEM budget: table conservatively counted as
    # double-buffered, plus double-buffered output blocks and a small f32 temp.
    phys_vmem = _physical_vmem_bytes()
    table_bytes = num_tokens * dim * itemsize
    est_bytes = 2 * table_bytes + 2 * t_blk * dim * itemsize + 8 * dim * 4
    if est_bytes > int(0.80 * phys_vmem):
        # TODO(synk): large-vocab regime (table does not fit per-core VMEM):
        # keep the table in HBM (memory_space=pl.ANY) and gather rows with
        # manual per-block async DMAs instead of the resident-table strategy.
        raise NotImplementedError(
            "embedding table too large for the VMEM-resident gather kernel "
            f"(needs ~{est_bytes} bytes, physical VMEM {phys_vmem} bytes)")
    vmem_limit = int(min(max(est_bytes + (16 << 20), 32 << 20),
                         phys_vmem - (8 << 20)))

    # Only split token blocks across TensorCores when there is enough grid
    # work to amortize each core's one-time table HBM fetch.
    semantics = ("parallel",) if num_blocks >= 8 else ("arbitrary",)

    kernel = functools.partial(_token_embed_kernel,
                               block_tokens=t_blk,
                               l2norm_embed=l2norm_embed)

    out_flat = pl.pallas_call(
        kernel,
        out_shape=jax.ShapeDtypeStruct((n_pad, dim), emb_table.dtype),
        grid_spec=pltpu.PrefetchScalarGridSpec(
            num_scalar_prefetch=1,          # flat token ids -> SMEM
            grid=(num_blocks,),             # one step per block of t_blk tokens
            in_specs=[
                # Full table as a single block with a constant index map:
                # fetched from HBM once, then resident in VMEM for all steps.
                pl.BlockSpec((num_tokens, dim), lambda i, ids: (0, 0)),
            ],
            out_specs=pl.BlockSpec((t_blk, dim), lambda i, ids: (i, 0)),
        ),
        compiler_params=pltpu.CompilerParams(
            dimension_semantics=semantics,
            vmem_limit_bytes=vmem_limit,
        ),
    )(ids, emb_table)

    out_flat = out_flat if n_pad == n else out_flat[:n]
    return out_flat.reshape(B, S, dim)


if __name__ == "__main__":
    # Deterministic parameter / input construction (nn.Embedding init ~ N(0, 1)).
    NUM_TOKENS = 64
    DIM = 128
    B, S = 2, 8

    key = jax.random.PRNGKey(0)
    k_emb, k_ids = jax.random.split(key)
    emb_table = jax.random.normal(k_emb, (NUM_TOKENS, DIM), dtype=jnp.float32)
    x = jax.random.randint(k_ids, (B, S), 0, NUM_TOKENS, dtype=jnp.int32)

    # Plain embedding lookup (l2norm_embed=False)
    out = jax.block_until_ready(token_embedding(x, emb_table, l2norm_embed=False))
    # l2norm_embed=True path
    out_l2 = jax.block_until_ready(token_embedding(x, emb_table, l2norm_embed=True))

    # Reference check against pure-JAX semantics
    ref = jnp.take(emb_table, x, axis=0)
    ref_norm = jnp.sqrt(jnp.sum(ref * ref, axis=-1, keepdims=True))
    ref_l2 = ref / jnp.maximum(ref_norm, 1e-12)

    assert out.shape == (B, S, DIM)
    assert jnp.allclose(out, ref, atol=1e-6), "embedding gather mismatch"
    assert jnp.allclose(out_l2, ref_l2, atol=1e-5), "l2norm embedding mismatch"

    print("KERNEL_OK")
</pallas_src>

<mosaic_0001>
module attributes {stable_mosaic.version = 11 : i64} {
  func.func @_token_embed_kernel(%arg0: i32, %arg1: memref<16xi32, #tpu.memory_space<smem>>, %arg2: memref<64x128xf32, #tpu.memory_space<vmem>>, %arg3: memref<16x128xf32, #tpu.memory_space<vmem>>) attributes {dimension_semantics = [#tpu.dimension_semantics<arbitrary>], iteration_bounds = array<i64: 1>, scalar_prefetch = 1 : i64, scratch_operands = 0 : i64, tpu.core_type = #tpu.core_type<tc>, window_params = [{pipeline_mode = #tpu.pipeline_mode<synchronous>, transform_indices = @transform_0, window_bounds = array<i64: 64, 128>}, {transform_indices = @transform_1, window_bounds = array<i64: 16, 128>}]} {
    %c16_i32 = arith.constant 16 : i32
    %0 = arith.muli %arg0, %c16_i32 : i32
    %c0_i32 = arith.constant 0 : i32
    %1 = arith.addi %0, %c0_i32 : i32
    %c0_i32_0 = arith.constant 0 : i32
    %2 = arith.addi %1, %c0_i32_0 : i32
    %3 = arith.index_cast %2 : i32 to index
    %4 = memref.load %arg1[%3] : memref<16xi32, #tpu.memory_space<smem>>
    %5 = arith.index_cast %4 : i32 to index
    %c0 = arith.constant 0 : index
    %6 = vector.load %arg2[%5, %c0] : memref<64x128xf32, #tpu.memory_space<vmem>>, vector<1x128xf32>
    %c0_i32_1 = arith.constant 0 : i32
    %7 = arith.addi %0, %c0_i32_1 : i32
    %c1_i32 = arith.constant 1 : i32
    %8 = arith.addi %7, %c1_i32 : i32
    %9 = arith.index_cast %8 : i32 to index
    %10 = memref.load %arg1[%9] : memref<16xi32, #tpu.memory_space<smem>>
    %11 = arith.index_cast %10 : i32 to index
    %c0_2 = arith.constant 0 : index
    %12 = vector.load %arg2[%11, %c0_2] : memref<64x128xf32, #tpu.memory_space<vmem>>, vector<1x128xf32>
    %c0_i32_3 = arith.constant 0 : i32
    %13 = arith.addi %0, %c0_i32_3 : i32
    %c2_i32 = arith.constant 2 : i32
    %14 = arith.addi %13, %c2_i32 : i32
    %15 = arith.index_cast %14 : i32 to index
    %16 = memref.load %arg1[%15] : memref<16xi32, #tpu.memory_space<smem>>
    %17 = arith.index_cast %16 : i32 to index
    %c0_4 = arith.constant 0 : index
    %18 = vector.load %arg2[%17, %c0_4] : memref<64x128xf32, #tpu.memory_space<vmem>>, vector<1x128xf32>
    %c0_i32_5 = arith.constant 0 : i32
    %19 = arith.addi %0, %c0_i32_5 : i32
    %c3_i32 = arith.constant 3 : i32
    %20 = arith.addi %19, %c3_i32 : i32
    %21 = arith.index_cast %20 : i32 to index
    %22 = memref.load %arg1[%21] : memref<16xi32, #tpu.memory_space<smem>>
    %23 = arith.index_cast %22 : i32 to index
    %c0_6 = arith.constant 0 : index
    %24 = vector.load %arg2[%23, %c0_6] : memref<64x128xf32, #tpu.memory_space<vmem>>, vector<1x128xf32>
    %c0_i32_7 = arith.constant 0 : i32
    %25 = arith.addi %0, %c0_i32_7 : i32
    %c4_i32 = arith.constant 4 : i32
    %26 = arith.addi %25, %c4_i32 : i32
    %27 = arith.index_cast %26 : i32 to index
    %28 = memref.load %arg1[%27] : memref<16xi32, #tpu.memory_space<smem>>
    %29 = arith.index_cast %28 : i32 to index
    %c0_8 = arith.constant 0 : index
    %30 = vector.load %arg2[%29, %c0_8] : memref<64x128xf32, #tpu.memory_space<vmem>>, vector<1x128xf32>
    %c0_i32_9 = arith.constant 0 : i32
    %31 = arith.addi %0, %c0_i32_9 : i32
    %c5_i32 = arith.constant 5 : i32
    %32 = arith.addi %31, %c5_i32 : i32
    %33 = arith.index_cast %32 : i32 to index
    %34 = memref.load %arg1[%33] : memref<16xi32, #tpu.memory_space<smem>>
    %35 = arith.index_cast %34 : i32 to index
    %c0_10 = arith.constant 0 : index
    %36 = vector.load %arg2[%35, %c0_10] : memref<64x128xf32, #tpu.memory_space<vmem>>, vector<1x128xf32>
    %c0_i32_11 = arith.constant 0 : i32
    %37 = arith.addi %0, %c0_i32_11 : i32
    %c6_i32 = arith.constant 6 : i32
    %38 = arith.addi %37, %c6_i32 : i32
    %39 = arith.index_cast %38 : i32 to index
    %40 = memref.load %arg1[%39] : memref<16xi32, #tpu.memory_space<smem>>
    %41 = arith.index_cast %40 : i32 to index
    %c0_12 = arith.constant 0 : index
    %42 = vector.load %arg2[%41, %c0_12] : memref<64x128xf32, #tpu.memory_space<vmem>>, vector<1x128xf32>
    %c0_i32_13 = arith.constant 0 : i32
    %43 = arith.addi %0, %c0_i32_13 : i32
    %c7_i32 = arith.constant 7 : i32
    %44 = arith.addi %43, %c7_i32 : i32
    %45 = arith.index_cast %44 : i32 to index
    %46 = memref.load %arg1[%45] : memref<16xi32, #tpu.memory_space<smem>>
    %47 = arith.index_cast %46 : i32 to index
    %c0_14 = arith.constant 0 : index
    %48 = vector.load %arg2[%47, %c0_14] : memref<64x128xf32, #tpu.memory_space<vmem>>, vector<1x128xf32>
    %49 = tpu.concatenate %6, %12, %18, %24, %30, %36, %42, %48 in 0 : vector<1x128xf32>, vector<1x128xf32>, vector<1x128xf32>, vector<1x128xf32>, vector<1x128xf32>, vector<1x128xf32>, vector<1x128xf32>, vector<1x128xf32> -> vector<8x128xf32>
    %c0_15 = arith.constant 0 : index
    %c0_16 = arith.constant 0 : index
    %50 = vector.load %arg3[%c0_15, %c0_16] : memref<16x128xf32, #tpu.memory_space<vmem>>, vector<8x128xf32>
    tpu.vector_store %arg3[%c0_15, %c0_16], %49 {strides = array<i32>} : memref<16x128xf32, #tpu.memory_space<vmem>>, vector<8x128xf32>,
    %c8_i32 = arith.constant 8 : i32
    %51 = arith.addi %0, %c8_i32 : i32
    %c0_i32_17 = arith.constant 0 : i32
    %52 = arith.addi %51, %c0_i32_17 : i32
    %53 = arith.index_cast %52 : i32 to index
    %54 = memref.load %arg1[%53] : memref<16xi32, #tpu.memory_space<smem>>
    %55 = arith.index_cast %54 : i32 to index
    %c0_18 = arith.constant 0 : index
    %56 = vector.load %arg2[%55, %c0_18] : memref<64x128xf32, #tpu.memory_space<vmem>>, vector<1x128xf32>
    %c8_i32_19 = arith.constant 8 : i32
    %57 = arith.addi %0, %c8_i32_19 : i32
    %c1_i32_20 = arith.constant 1 : i32
    %58 = arith.addi %57, %c1_i32_20 : i32
    %59 = arith.index_cast %58 : i32 to index
    %60 = memref.load %arg1[%59] : memref<16xi32, #tpu.memory_space<smem>>
    %61 = arith.index_cast %60 : i32 to index
    %c0_21 = arith.constant 0 : index
    %62 = vector.load %arg2[%61, %c0_21] : memref<64x128xf32, #tpu.memory_space<vmem>>, vector<1x128xf32>
    %c8_i32_22 = arith.constant 8 : i32
    %63 = arith.addi %0, %c8_i32_22 : i32
    %c2_i32_23 = arith.constant 2 : i32
    %64 = arith.addi %63, %c2_i32_23 : i32
    %65 = arith.index_cast %64 : i32 to index
    %66 = memref.load %arg1[%65] : memref<16xi32, #tpu.memory_space<smem>>
    %67 = arith.index_cast %66 : i32 to index
    %c0_24 = arith.constant 0 : index
    %68 = vector.load %arg2[%67, %c0_24] : memref<64x128xf32, #tpu.memory_space<vmem>>, vector<1x128xf32>
    %c8_i32_25 = arith.constant 8 : i32
    %69 = arith.addi %0, %c8_i32_25 : i32
    %c3_i32_26 = arith.constant 3 : i32
    %70 = arith.addi %69, %c3_i32_26 : i32
    %71 = arith.index_cast %70 : i32 to index
    %72 = memref.load %arg1[%71] : memref<16xi32, #tpu.memory_space<smem>>
    %73 = arith.index_cast %72 : i32 to index
    %c0_27 = arith.constant 0 : index
    %74 = vector.load %arg2[%73, %c0_27] : memref<64x128xf32, #tpu.memory_space<vmem>>, vector<1x128xf32>
    %c8_i32_28 = arith.constant 8 : i32
    %75 = arith.addi %0, %c8_i32_28 : i32
    %c4_i32_29 = arith.constant 4 : i32
    %76 = arith.addi %75, %c4_i32_29 : i32
    %77 = arith.index_cast %76 : i32 to index
    %78 = memref.load %arg1[%77] : memref<16xi32, #tpu.memory_space<smem>>
    %79 = arith.index_cast %78 : i32 to index
    %c0_30 = arith.constant 0 : index
    %80 = vector.load %arg2[%79, %c0_30] : memref<64x128xf32, #tpu.memory_space<vmem>>, vector<1x128xf32>
    %c8_i32_31 = arith.constant 8 : i32
    %81 = arith.addi %0, %c8_i32_31 : i32
    %c5_i32_32 = arith.constant 5 : i32
    %82 = arith.addi %81, %c5_i32_32 : i32
    %83 = arith.index_cast %82 : i32 to index
    %84 = memref.load %arg1[%83] : memref<16xi32, #tpu.memory_space<smem>>
    %85 = arith.index_cast %84 : i32 to index
    %c0_33 = arith.constant 0 : index
    %86 = vector.load %arg2[%85, %c0_33] : memref<64x128xf32, #tpu.memory_space<vmem>>, vector<1x128xf32>
    %c8_i32_34 = arith.constant 8 : i32
    %87 = arith.addi %0, %c8_i32_34 : i32
    %c6_i32_35 = arith.constant 6 : i32
    %88 = arith.addi %87, %c6_i32_35 : i32
    %89 = arith.index_cast %88 : i32 to index
    %90 = memref.load %arg1[%89] : memref<16xi32, #tpu.memory_space<smem>>
    %91 = arith.index_cast %90 : i32 to index
    %c0_36 = arith.constant 0 : index
    %92 = vector.load %arg2[%91, %c0_36] : memref<64x128xf32, #tpu.memory_space<vmem>>, vector<1x128xf32>
    %c8_i32_37 = arith.constant 8 : i32
    %93 = arith.addi %0, %c8_i32_37 : i32
    %c7_i32_38 = arith.constant 7 : i32
    %94 = arith.addi %93, %c7_i32_38 : i32
    %95 = arith.index_cast %94 : i32 to index
    %96 = memref.load %arg1[%95] : memref<16xi32, #tpu.memory_space<smem>>
    %97 = arith.index_cast %96 : i32 to index
    %c0_39 = arith.constant 0 : index
    %98 = vector.load %arg2[%97, %c0_39] : memref<64x128xf32, #tpu.memory_space<vmem>>, vector<1x128xf32>
    %99 = tpu.concatenate %56, %62, %68, %74, %80, %86, %92, %98 in 0 : vector<1x128xf32>, vector<1x128xf32>, vector<1x128xf32>, vector<1x128xf32>, vector<1x128xf32>, vector<1x128xf32>, vector<1x128xf32>, vector<1x128xf32> -> vector<8x128xf32>
    %c8 = arith.constant 8 : index
    %c0_40 = arith.constant 0 : index
    %100 = vector.load %arg3[%c8, %c0_40] : memref<16x128xf32, #tpu.memory_space<vmem>>, vector<8x128xf32>
    tpu.vector_store %arg3[%c8, %c0_40], %99 {strides = array<i32>} : memref<16x128xf32, #tpu.memory_space<vmem>>, vector<8x128xf32>,
    return
  }
  func.func @transform_0(%arg0: i32, %arg1: memref<16xi32, #tpu.memory_space<smem>>) -> (i32, i32) {
    %c0_i32 = arith.constant 0 : i32
    %c0_i32_0 = arith.constant 0 : i32
    %c0_i32_1 = arith.constant 0 : i32
    return %c0_i32, %c0_i32_0 : i32, i32
  }
  func.func @transform_1(%arg0: i32, %arg1: memref<16xi32, #tpu.memory_space<smem>>) -> (i32, i32) {
    %c0_i32 = arith.constant 0 : i32
    %c0_i32_0 = arith.constant 0 : i32
    return %arg0, %c0_i32 : i32, i32
  }
}

</mosaic_0001>

<llo_original>
// kernel: tpu_custom_call.1
$region0: #{tpu_custom_call.1}
  #allocation0 [shape = 'u32[]', space=smem, size = 0x4, offset = 0x4, fixed_abs, tag = 'smem constant byte address 0x4 - core index']
  #allocation1 [shape = 'u32[144,128]{1,0:T(1,128)}', space=vmem, size = 0x12000, scoped, tag = 'internal scratch']
  #allocation2 [shape = 's32[1]{0}', space=sflag, size = 0x4, scoped, tag = 'scoped memory for tpu_custom_call.1']
  #allocation3 [shape = 'u8[512]{0}', space=smem, size = 0x200, scoped, tag = 'prefetched SMEM operand 0']
  %s0 = inlined_call_operand.hbm [shape: s32[16], index: 0, kind: input, shape index: {}]
  %s1 = inlined_call_operand.hbm [shape: f32[64,128], index: 1, kind: input, shape index: {}]
  %s2 = inlined_call_operand.hbm [shape: f32[16,128], index: 2, kind: output, shape index: {}]
  %s3 = sld [smem:[#allocation0]]
  $region18: #{tpu_custom_call.1} parent=0
    _
  %s5 = ssub.s32 1, %s3
  %s6 = scalar_select 0, %s5, %s3
  %8 = dma.hbm_to_smem %s0, 16, [#allocation3], [#allocation2]
  %9 = dma.done [#allocation2], 16
  %10 = sfence
  $region1: #{tpu_custom_call.1} parent=0
    #allocation4 [shape = 'u8[32768]{0}', space=vmem, size = 0x8000, scoped, tag = 'input window, operand 1, single buffered']
    #allocation5 [shape = 's32[1]{0}', space=sflag, size = 0x4, scoped, tag = 'scoped memory for tpu_custom_call.1']
    #allocation6 [shape = 's32[1]{0}', space=sflag, size = 0x4, scoped, tag = 'scoped memory for tpu_custom_call.1']
    #allocation7 [shape = 'u8[8192]{0}', space=vmem, size = 0x2000, scoped, tag = 'output window, operand 0, single buffered']
    %11 = vsyncpa [#allocation5], 0
    %12 = vsyncpa [#allocation6], 0
    // Predicated region
    $region2: #{tpu_custom_call.1} parent=1 // pred_check
      _
    $region3: #{tpu_custom_call.1} parent=1 // pred_check_branch
      %14 = sbr.rel (0) target = $region5
    $region4: #{tpu_custom_call.1} parent=1 // pred_region
      %s16 = ssub.s32 1024, 1024
      %17 = vsyncadd [#allocation5], %s16
      %s18 = sshll.u32 [#allocation4], 4
      %s19 = int_to_ptr.vmem [resolvable:$true] %s18
      %24 = dma.hbm_to_vmem [thread:$0]  %s1, 1024, %s19, [#allocation5], 128, 128, 8
    $region5: #{tpu_custom_call.1} parent=1 // pred_fallthru
      _
    // Predicated region
    $region6: #{tpu_custom_call.1} parent=1 // pred_check
      _
    $region7: #{tpu_custom_call.1} parent=1 // pred_check_branch
      %26 = sbr.rel (0) target = $region9
    $region8: #{tpu_custom_call.1} parent=1 // pred_region
      %27 = dma.done [#allocation5], 1024
    $region9: #{tpu_custom_call.1} parent=1 // pred_fallthru
      _
    %s28 = smul.u32 0, 16
    %s29 = sld [smem:[#allocation3 + %s28]]
    %s30 = scalar_lea.vmem [#allocation4], %s29
    %v31 = vld [vmem:[%s30] sm:$0x1]
    %s32 = sadd.s32 %s28, 1
    %s33 = sld [smem:[#allocation3 + %s32]]
    %s34 = scalar_lea.vmem [#allocation4], %s33
    %v35 = vld [vmem:[%s34] sm:$0x1]
    %s36 = sadd.s32 %s28, 2
    %s37 = sld [smem:[#allocation3 + %s36]]
    %s38 = scalar_lea.vmem [#allocation4], %s37
    %v39 = vld [vmem:[%s38] sm:$0x1]
    %s40 = sadd.s32 %s28, 3
    %s41 = sld [smem:[#allocation3 + %s40]]
    %s42 = scalar_lea.vmem [#allocation4], %s41
    %v43 = vld [vmem:[%s42] sm:$0x1]
    %s44 = sadd.s32 %s28, 4
    %s45 = sld [smem:[#allocation3 + %s44]]
    %s46 = scalar_lea.vmem [#allocation4], %s45
    %v47 = vld [vmem:[%s46] sm:$0x1]
    %s48 = sadd.s32 %s28, 5
    %s49 = sld [smem:[#allocation3 + %s48]]
    %s50 = scalar_lea.vmem [#allocation4], %s49
    %v51 = vld [vmem:[%s50] sm:$0x1]
    %s52 = sadd.s32 %s28, 6
    %s53 = sld [smem:[#allocation3 + %s52]]
    %s54 = scalar_lea.vmem [#allocation4], %s53
    %v55 = vld [vmem:[%s54] sm:$0x1]
    %s56 = sadd.s32 %s28, 7
    %s57 = sld [smem:[#allocation3 + %s56]]
    %s58 = scalar_lea.vmem [#allocation4], %s57
    %v59 = vld [vmem:[%s58] sm:$0x1]
    %v61 = vrot.slane %v35, 7
    %v64 = vrot.slane %v39, 6
    %v67 = vrot.slane %v43, 5
    %v70 = vrot.slane %v47, 4
    %v73 = vrot.slane %v51, 3
    %v76 = vrot.slane %v55, 2
    %v79 = vrot.slane %v59, 1
    %vm81 = vcmask 1040384
    %v82 = vsel %vm81, %v31, %v61
    %vm83 = vcmask 1041408
    %v84 = vsel %vm83, %v82, %v64
    %vm85 = vcmask 1042432
    %v86 = vsel %vm85, %v84, %v67
    %vm87 = vcmask 1043456
    %v88 = vsel %vm87, %v86, %v70
    %vm89 = vcmask 1044480
    %v90 = vsel %vm89, %v88, %v73
    %vm91 = vcmask 1045504
    %v92 = vsel %vm91, %v90, %v76
    %vm93 = vcmask 1046528
    %v94 = vsel %vm93, %v92, %v79
    %95 = vst [vmem:[#allocation7] sm:$0xff] %v94
    %s96 = sadd.s32 %s28, 8
    %s97 = sld [smem:[#allocation3 + %s96]]
    %s98 = scalar_lea.vmem [#allocation4], %s97
    %v99 = vld [vmem:[%s98] sm:$0x1]
    %s100 = sadd.s32 %s28, 9
    %s101 = sld [smem:[#allocation3 + %s100]]
    %s102 = scalar_lea.vmem [#allocation4], %s101
    %v103 = vld [vmem:[%s102] sm:$0x1]
    %s104 = sadd.s32 %s28, 10
    %s105 = sld [smem:[#allocation3 + %s104]]
    %s106 = scalar_lea.vmem [#allocation4], %s105
    %v107 = vld [vmem:[%s106] sm:$0x1]
    %s108 = sadd.s32 %s28, 11
    %s109 = sld [smem:[#allocation3 + %s108]]
    %s110 = scalar_lea.vmem [#allocation4], %s109
    %v111 = vld [vmem:[%s110] sm:$0x1]
    %s112 = sadd.s32 %s28, 12
    %s113 = sld [smem:[#allocation3 + %s112]]
    %s114 = scalar_lea.vmem [#allocation4], %s113
    %v115 = vld [vmem:[%s114] sm:$0x1]
    %s116 = sadd.s32 %s28, 13
    %s117 = sld [smem:[#allocation3 + %s116]]
    %s118 = scalar_lea.vmem [#allocation4], %s117
    %v119 = vld [vmem:[%s118] sm:$0x1]
    %s120 = sadd.s32 %s28, 14
    %s121 = sld [smem:[#allocation3 + %s120]]
    %s122 = scalar_lea.vmem [#allocation4], %s121
    %v123 = vld [vmem:[%s122] sm:$0x1]
    %s124 = sadd.s32 %s28, 15
    %s125 = sld [smem:[#allocation3 + %s124]]
    %s126 = scalar_lea.vmem [#allocation4], %s125
    %v127 = vld [vmem:[%s126] sm:$0x1]
    %v129 = vrot.slane %v103, 7
    %v132 = vrot.slane %v107, 6
    %v135 = vrot.slane %v111, 5
    %v138 = vrot.slane %v115, 4
    %v141 = vrot.slane %v119, 3
    %v144 = vrot.slane %v123, 2
    %v147 = vrot.slane %v127, 1
    %v149 = vsel %vm81, %v99, %v129
    %v150 = vsel %vm83, %v149, %v132
    %v151 = vsel %vm85, %v150, %v135
    %v152 = vsel %vm87, %v151, %v138
    %v153 = vsel %vm89, %v152, %v141
    %v154 = vsel %vm91, %v153, %v144
    %v155 = vsel %vm93, %v154, %v147
    %156 = vst [vmem:[#allocation7 + $0x8] sm:$0xff] %v155
    // Predicated region
    $region10: #{tpu_custom_call.1} parent=1 // pred_check
      _
    $region11: #{tpu_custom_call.1} parent=1 // pred_check_branch
      %158 = sbr.rel (0) target = $region13
    $region12: #{tpu_custom_call.1} parent=1 // pred_region
      %s160 = ssub.s32 256, 256
      %161 = vsyncadd [#allocation6], %s160
      %s162 = sshll.u32 [#allocation7], 4
      %s163 = int_to_ptr.vmem [resolvable:$true] %s162
      %168 = dma.vmem_to_hbm [thread:$0]  %s163, 256, %s2, [#allocation6], 128, 128, 8
    $region13: #{tpu_custom_call.1} parent=1 // pred_fallthru
      _
    // Predicated region
    $region14: #{tpu_custom_call.1} parent=1 // pred_check
      _
    $region15: #{tpu_custom_call.1} parent=1 // pred_check_branch
      %170 = sbr.rel (0) target = $region17
    $region16: #{tpu_custom_call.1} parent=1 // pred_region
      %171 = dma.done [#allocation6], 256
    $region17: #{tpu_custom_call.1} parent=1 // pred_fallthru
      _
    %172 = vsyncpa [#allocation5], 1
    %173 = vsyncpa [#allocation6], 1

</llo_original>
